<compile_context>
chip_gen: v5e
topology: v5e:2x2
jax: 0.10.0
libtpu: 0.0.40
codegen_flags: <defaults>
</compile_context>

<pallas_src>
import jax
import jax.numpy as jnp
from jax import lax
from jax.experimental import pallas as pl
from jax.experimental.pallas import tpu as pltpu

TOPK = "topk"
INDEX = "index"


# ------------------------------- helpers ----------------------------------- #

def _cdiv(a, b):
    return -(-a // b)


def _round_up(a, m):
    return _cdiv(a, m) * m


def _pick_tile_m(B):
    return min(256, _round_up(B, 8))


def _pick_tile_nk(N, K):
    tn = min(256, _round_up(N, 128))   # lane-dense output: multiple of 128
    tk = min(512, _round_up(K, 128))
    return tn, tk


def _pad2d(a, rows, cols):
    r, c = a.shape
    if r == rows and c == cols:
        return a
    return jnp.zeros((rows, cols), a.dtype).at[:r, :c].set(a)


# ----------------------------- Pallas kernel -------------------------------- #

def _linear_kernel(x_ref, w_ref, b_ref, o_ref, acc_ref):
    """Computes one (tm, tn) output tile; grid axis 2 walks the K tiles.

    x_ref:   (tm, tk)  compute dtype (bf16)
    w_ref:   (tn, tk)  compute dtype (bf16)  -- PyTorch (out, in) layout, no transpose
    b_ref:   (1,  tn)  float32
    o_ref:   (tm, tn)  out dtype
    acc_ref: (tm, tn)  float32 VMEM scratch accumulator
    """
    k = pl.program_id(2)

    @pl.when(k == 0)
    def _init():
        acc_ref[...] = jnp.zeros_like(acc_ref)

    # Contract K (axis 1 of both operands): equivalent to x @ w.T, MXU, f32 accumulate.
    acc_ref[...] += lax.dot_general(
        x_ref[...], w_ref[...],
        dimension_numbers=(((1,), (1,)), ((), ())),
        preferred_element_type=jnp.float32,
    )

    @pl.when(k == pl.num_programs(2) - 1)
    def _finalize():
        o_ref[...] = (acc_ref[...] + b_ref[...]).astype(o_ref.dtype)


def _tiled_linear_call(x_p, w_p, b_p, *, grid, tm, tn, tk, out_dtype, flops_mnk):
    """Launch the tiled matmul+bias kernel. Arrays are already padded/cast."""
    gm, gn, gk = grid
    M, N, K = flops_mnk
    cost = pl.CostEstimate(
        flops=2 * M * N * K,
        transcendentals=0,
        bytes_accessed=(x_p.size * x_p.dtype.itemsize
                        + gn * tn * gk * tk * w_p.dtype.itemsize
                        + gn * tn * b_p.dtype.itemsize
                        + gm * tm * gn * tn * jnp.dtype(out_dtype).itemsize),
    )
    return pl.pallas_call(
        _linear_kernel,
        out_shape=jax.ShapeDtypeStruct((gm * tm, gn * tn), out_dtype),
        grid_spec=pltpu.PrefetchScalarGridSpec(
            num_scalar_prefetch=0,
            grid=(gm, gn, gk),
            in_specs=[
                pl.BlockSpec((tm, tk), lambda i, j, k: (i, k)),   # x tile
                pl.BlockSpec((tn, tk), lambda i, j, k: (j, k)),   # weight tile (out, in)
                pl.BlockSpec((1, tn), lambda i, j, k: (0, j)),    # bias tile
            ],
            out_specs=pl.BlockSpec((tm, tn), lambda i, j, k: (i, j)),
            scratch_shapes=[pltpu.VMEM((tm, tn), jnp.float32)],
        ),
        compiler_params=pltpu.CompilerParams(
            dimension_semantics=("parallel", "parallel", "arbitrary")),
        cost_estimate=cost,
    )(x_p, w_p, b_p)


def pallas_linear(x, weight, bias=None, compute_dtype=jnp.bfloat16):
    """y = x @ weight.T + bias with weight in (out_features, in_features) layout.

    Generic path (used for INDEX-mode gathered weights): casts + pads per call.
    """
    B, K = x.shape
    N, K2 = weight.shape
    assert K == K2, (K, K2)
    tm = _pick_tile_m(B)
    tn, tk = _pick_tile_nk(N, K)
    gm, gn, gk = _cdiv(B, tm), _cdiv(N, tn), _cdiv(K, tk)

    x_p = _pad2d(x.astype(compute_dtype), gm * tm, gk * tk)
    w_p = _pad2d(weight.astype(compute_dtype), gn * tn, gk * tk)
    b = bias if bias is not None else jnp.zeros((N,), jnp.float32)
    b_p = _pad2d(b.astype(jnp.float32).reshape(1, N), 1, gn * tn)

    out = _tiled_linear_call(x_p, w_p, b_p, grid=(gm, gn, gk),
                             tm=tm, tn=tn, tk=tk, out_dtype=x.dtype,
                             flops_mnk=(B, N, K))
    return out[:B, :N]


# --------------------------- DynamicLinear (JAX) ---------------------------- #

class DynamicLinear:
    """JAX/Pallas port of sugar.modules.dynamicarch.DynamicLinear forward semantics."""

    def __init__(self, in_features: int, out_features: int, bias: bool = True,
                 key=None, compute_dtype=jnp.bfloat16):
        self.in_features = in_features
        self.out_features = out_features
        self.compute_dtype = compute_dtype
        if key is None:
            key = jax.random.PRNGKey(0)
        kw, kb = jax.random.split(key)
        # Deterministic init mimicking nn.Linear's uniform(-1/sqrt(in), 1/sqrt(in)).
        bound = 1.0 / (in_features ** 0.5)
        self.weight = jax.random.uniform(
            kw, (out_features, in_features), jnp.float32, -bound, bound)
        self.bias = (jax.random.uniform(kb, (out_features,), jnp.float32, -bound, bound)
                     if bias else None)

        self.in_mode = TOPK
        self.out_mode = TOPK
        self.active_in_features = in_features
        self.active_out_features = out_features
        self.active_in_indices = jnp.arange(in_features, dtype=jnp.int32)
        self.active_out_indices = jnp.arange(out_features, dtype=jnp.int32)

        # --- Cached, tile-padded, bf16 weight & f32 bias (reused by every TOPK/full
        # call: no per-call transpose, no per-call sliced-weight HBM copy). ---
        self._tn, self._tk = _pick_tile_nk(out_features, in_features)
        n_pad = _round_up(out_features, self._tn)
        k_pad = _round_up(in_features, self._tk)
        self._w_prep = _pad2d(self.weight.astype(self.compute_dtype), n_pad, k_pad)
        b_full = self.bias if self.bias is not None else jnp.zeros((out_features,),
                                                                   jnp.float32)
        self._b_prep = _pad2d(b_full.astype(jnp.float32).reshape(1, -1), 1, n_pad)

    # config setter mirroring the PyTorch property semantics
    def set_config(self, config):
        if config is None:
            config = (None, None)
        in_feats, out_feats = config
        if in_feats is None:
            self.active_in_features = self.in_features
            self.active_in_indices = jnp.arange(self.in_features, dtype=jnp.int32)
        elif isinstance(in_feats, int):
            self.in_mode = TOPK
            self.active_in_features = in_feats
        else:
            self.in_mode = INDEX
            self.active_in_indices = jnp.asarray(in_feats, dtype=jnp.int32)
        if out_feats is None:
            self.active_out_features = self.out_features
            self.active_out_indices = jnp.arange(self.out_features, dtype=jnp.int32)
        elif isinstance(out_feats, int):
            self.out_mode = TOPK
            self.active_out_features = out_feats
        else:
            self.out_mode = INDEX
            self.active_out_indices = jnp.asarray(out_feats, dtype=jnp.int32)

    @property
    def weight_bias(self):
        """Slice / index-select the active sub-weight & sub-bias (glue, plain JAX)."""
        # TODO(synk): INDEX-mode row gather could be moved into the kernel's DMA stream
        # via PrefetchScalarGridSpec scalar prefetch; kept as jnp.take glue so output
        # tiles stay lane-dense (>=128-wide).
        biases = None
        is_bias = self.bias is not None
        if self.in_mode == TOPK:
            weights = self.weight[:, : self.active_in_features]
        else:
            weights = jnp.take(self.weight, self.active_in_indices, axis=1)
        if self.out_mode == TOPK:
            weights = weights[: self.active_out_features]
            if is_bias:
                biases = self.bias[: self.active_out_features]
        else:
            weights = jnp.take(weights, self.active_out_indices, axis=0)
            if is_bias:
                biases = jnp.take(self.bias, self.active_out_indices, axis=0)
        return weights, biases

    # -- fast path: prefix (TOPK / full) window into the cached padded weight --
    def _forward_prefix(self, x, k_active, n_active):
        B, kx = x.shape
        assert kx == k_active, (kx, k_active)
        tm = _pick_tile_m(B)
        tn, tk = self._tn, self._tk
        gm = _cdiv(B, tm)
        gn = _cdiv(n_active, tn)
        gk = _cdiv(k_active, tk)
        # Zero-pad x out to the tile grid; zeros beyond k_active neutralize the
        # (real-valued) inactive weight columns inside the boundary tile.
        x_p = _pad2d(x.astype(self.compute_dtype), gm * tm, gk * tk)
        out = _tiled_linear_call(
            x_p, self._w_prep, self._b_prep, grid=(gm, gn, gk),
            tm=tm, tn=tn, tk=tk, out_dtype=x.dtype,
            flops_mnk=(B, n_active, k_active))
        return out[:B, :n_active]

    def __call__(self, x):
        full_in = (
            (self.in_mode == TOPK and self.active_in_features == self.in_features)
            or (self.in_mode == INDEX and self.active_in_indices.size == self.in_features)
        )
        full_out = (
            (self.out_mode == TOPK and self.active_out_features == self.out_features)
            or (self.out_mode == INDEX and self.active_out_indices.size == self.out_features)
        )
        if full_in and full_out:
            # matches `return self.linear(x)` in PyTorch (full weight, no permutation)
            return self._forward_prefix(x, self.in_features, self.out_features)
        if self.in_mode == TOPK and self.out_mode == TOPK:
            # prefix window: no sliced-weight copy, grid sized by active extents
            return self._forward_prefix(x, self.active_in_features,
                                        self.active_out_features)
        weights, biases = self.weight_bias
        return pallas_linear(x, weights, biases, compute_dtype=self.compute_dtype)


# --------------------------------- main ------------------------------------- #

if __name__ == "__main__":
    key = jax.random.PRNGKey(0)
    k_mod, k_x = jax.random.split(key)

    batch, in_features, out_features = 4, 32, 16
    layer = DynamicLinear(in_features, out_features, bias=True, key=k_mod)

    cd = layer.compute_dtype

    def ref_linear(x, w, b):
        # Reference matches the kernel's numerics: bf16 operands, f32 accumulation.
        xf = x.astype(cd).astype(jnp.float32)
        wf = w.astype(cd).astype(jnp.float32)
        y = xf @ wf.T
        return y + b if b is not None else y

    ok = True
    x_full = jax.random.normal(k_x, (batch, in_features), jnp.float32)

    # Case 1: full configuration (default) -> y = x W^T + b with the full weight.
    y1 = jax.block_until_ready(layer(x_full))
    ref1 = ref_linear(x_full, layer.weight, layer.bias)
    ok &= bool(jnp.allclose(y1, ref1, atol=1e-3, rtol=1e-3))
    ok &= (y1.shape == (batch, out_features))

    # Case 2: TOPK mode -- active_in=24, active_out=8. Input has 24 features.
    layer.set_config((24, 8))
    x_topk = x_full[:, :24]
    y2 = jax.block_until_ready(layer(x_topk))
    ref2 = ref_linear(x_topk, layer.weight[:8, :24], layer.bias[:8])
    ok &= bool(jnp.allclose(y2, ref2, atol=1e-3, rtol=1e-3))
    ok &= (y2.shape == (batch, 8))

    # Case 3: INDEX mode -- explicit in/out indices.
    in_idx = jnp.array([0, 3, 5, 7, 11, 13, 17, 19, 23, 29, 30, 31], dtype=jnp.int32)
    out_idx = jnp.array([1, 2, 4, 8, 15], dtype=jnp.int32)
    layer.set_config((in_idx, out_idx))
    x_idx = x_full[:, : in_idx.size]
    y3 = jax.block_until_ready(layer(x_idx))
    w_sel = jnp.take(jnp.take(layer.weight, in_idx, axis=1), out_idx, axis=0)
    b_sel = jnp.take(layer.bias, out_idx, axis=0)
    ref3 = ref_linear(x_idx, w_sel, b_sel)
    ok &= bool(jnp.allclose(y3, ref3, atol=1e-3, rtol=1e-3))
    ok &= (y3.shape == (batch, 5))

    print("KERNEL_OK" if ok else "MISMATCH")
</pallas_src>

<mosaic_0001>
module attributes {stable_mosaic.version = 11 : i64} {
  func.func @_linear_kernel(%arg0: i32, %arg1: i32, %arg2: i32, %arg3: memref<8x128xbf16, #tpu.memory_space<vmem>>, %arg4: memref<128x128xbf16, #tpu.memory_space<vmem>>, %arg5: memref<1x128xf32, #tpu.memory_space<vmem>>, %arg6: memref<8x128xf32, #tpu.memory_space<vmem>>, %arg7: memref<8x128xf32, #tpu.memory_space<vmem>>) attributes {dimension_semantics = [#tpu.dimension_semantics<parallel>, #tpu.dimension_semantics<parallel>, #tpu.dimension_semantics<arbitrary>], iteration_bounds = array<i64: 1, 1, 1>, scalar_prefetch = 0 : i64, scratch_operands = 1 : i64, tpu.core_type = #tpu.core_type<tc>, window_params = [{transform_indices = @transform_0, window_bounds = array<i64: 8, 128>}, {transform_indices = @transform_1, window_bounds = array<i64: 128, 128>}, {transform_indices = @transform_2, window_bounds = array<i64: 1, 128>}, {transform_indices = @transform_3, window_bounds = array<i64: 8, 128>}]} {
    %c0_i32 = arith.constant 0 : i32
    %0 = arith.cmpi eq, %arg2, %c0_i32 : i32
    %1 = arith.extui %0 : i1 to i32
    %c0_i32_0 = arith.constant 0 : i32
    %2 = arith.cmpi ne, %1, %c0_i32_0 : i32
    scf.if %2 {
      %cst_10 = arith.constant 0.000000e+00 : f32
      %12 = vector.broadcast %cst_10 : f32 to vector<8x128xf32>
      %c0_11 = arith.constant 0 : index
      %c0_12 = arith.constant 0 : index
      %13 = vector.load %arg7[%c0_11, %c0_12] : memref<8x128xf32, #tpu.memory_space<vmem>>, vector<8x128xf32>
      tpu.vector_store %arg7[%c0_11, %c0_12], %12 {strides = array<i32>} : memref<8x128xf32, #tpu.memory_space<vmem>>, vector<8x128xf32>,
    } else {
    }
    %c0 = arith.constant 0 : index
    %c0_1 = arith.constant 0 : index
    %3 = vector.load %arg7[%c0, %c0_1] : memref<8x128xf32, #tpu.memory_space<vmem>>, vector<8x128xf32>
    %c0_2 = arith.constant 0 : index
    %c0_3 = arith.constant 0 : index
    %4 = vector.load %arg3[%c0_2, %c0_3] : memref<8x128xbf16, #tpu.memory_space<vmem>>, vector<8x128xbf16>
    %c0_4 = arith.constant 0 : index
    %c0_5 = arith.constant 0 : index
    %5 = vector.load %arg4[%c0_4, %c0_5] : memref<128x128xbf16, #tpu.memory_space<vmem>>, vector<128x128xbf16>
    %cst = arith.constant dense<0.000000e+00> : vector<8x128xf32>
    %6 = tpu.matmul %4, %5, %cst {dimension_numbers = #tpu.dot_dimension_numbers<[1], [1], [0], [0], [0, 0, 1, 0], [], []>} : vector<8x128xbf16>, vector<128x128xbf16>, vector<8x128xf32> -> vector<8x128xf32>
    %7 = arith.addf %3, %6 : vector<8x128xf32>
    %c0_6 = arith.constant 0 : index
    %c0_7 = arith.constant 0 : index
    %8 = vector.load %arg7[%c0_6, %c0_7] : memref<8x128xf32, #tpu.memory_space<vmem>>, vector<8x128xf32>
    tpu.vector_store %arg7[%c0_6, %c0_7], %7 {strides = array<i32>} : memref<8x128xf32, #tpu.memory_space<vmem>>, vector<8x128xf32>,
    %c0_i32_8 = arith.constant 0 : i32
    %9 = arith.cmpi eq, %arg2, %c0_i32_8 : i32
    %10 = arith.extui %9 : i1 to i32
    %c0_i32_9 = arith.constant 0 : i32
    %11 = arith.cmpi ne, %10, %c0_i32_9 : i32
    scf.if %11 {
      %c0_10 = arith.constant 0 : index
      %c0_11 = arith.constant 0 : index
      %12 = vector.load %arg7[%c0_10, %c0_11] : memref<8x128xf32, #tpu.memory_space<vmem>>, vector<8x128xf32>
      %c0_12 = arith.constant 0 : index
      %c0_13 = arith.constant 0 : index
      %13 = vector.load %arg5[%c0_12, %c0_13] : memref<1x128xf32, #tpu.memory_space<vmem>>, vector<1x128xf32>
      %14 = vector.broadcast %13 : vector<1x128xf32> to vector<8x128xf32>
      %15 = arith.addf %12, %14 : vector<8x128xf32>
      %c0_14 = arith.constant 0 : index
      %c0_15 = arith.constant 0 : index
      %16 = vector.load %arg6[%c0_14, %c0_15] : memref<8x128xf32, #tpu.memory_space<vmem>>, vector<8x128xf32>
      tpu.vector_store %arg6[%c0_14, %c0_15], %15 {strides = array<i32>} : memref<8x128xf32, #tpu.memory_space<vmem>>, vector<8x128xf32>,
    } else {
    }
    return
  }
  func.func @transform_0(%arg0: i32, %arg1: i32, %arg2: i32) -> (i32, i32) {
    %c0_i32 = arith.constant 0 : i32
    return %arg0, %arg2 : i32, i32
  }
  func.func @transform_1(%arg0: i32, %arg1: i32, %arg2: i32) -> (i32, i32) {
    %c0_i32 = arith.constant 0 : i32
    return %arg1, %arg2 : i32, i32
  }
  func.func @transform_2(%arg0: i32, %arg1: i32, %arg2: i32) -> (i32, i32) {
    %c0_i32 = arith.constant 0 : i32
    %c0_i32_0 = arith.constant 0 : i32
    return %c0_i32, %arg1 : i32, i32
  }
  func.func @transform_3(%arg0: i32, %arg1: i32, %arg2: i32) -> (i32, i32) {
    %c0_i32 = arith.constant 0 : i32
    return %arg0, %arg1 : i32, i32
  }
}

</mosaic_0001>

<llo_original>
// kernel: tpu_custom_call.1
$region0: #{tpu_custom_call.1}
  #allocation0 [shape = 'u32[]', space=smem, size = 0x4, offset = 0x4, fixed_abs, tag = 'smem constant byte address 0x4 - core index']
  #allocation1 [shape = 'u32[72,128]{1,0:T(1,128)}', space=vmem, size = 0x9000, scoped, tag = 'internal scratch']
  #allocation2 [shape = 'f32[8,128]{1,0:T(8,128)}', space=vmem, size = 0x1000, scoped, tag = 'scratch operand']
  %s0 = inlined_call_operand.hbm [shape: bf16[8,128], index: 0, kind: input, shape index: {}]
  %s1 = inlined_call_operand.hbm [shape: bf16[128,128], index: 1, kind: input, shape index: {}]
  %s2 = inlined_call_operand.vmem [shape: f32[1,128], index: 2, kind: input, shape index: {}]
  %s3 = inlined_call_operand.hbm [shape: f32[8,128], index: 3, kind: output, shape index: {}]
  %s4 = sld [smem:[#allocation0]]
  $region38: #{tpu_custom_call.1} parent=0
    _
  %s6 = ssub.s32 1, %s4
  %s7 = scalar_select 0, %s6, %s4
  $region1: #{tpu_custom_call.1} parent=0
    #allocation3 [shape = 'u8[2048]{0}', space=vmem, size = 0x800, scoped, tag = 'input window, operand 0, single buffered']
    #allocation4 [shape = 's32[1]{0}', space=sflag, size = 0x4, scoped, tag = 'scoped memory for tpu_custom_call.1']
    #allocation5 [shape = 's32[1]{0}', space=sflag, size = 0x4, scoped, tag = 'scoped memory for tpu_custom_call.1']
    #allocation6 [shape = 'u8[32768]{0}', space=vmem, size = 0x8000, scoped, tag = 'input window, operand 1, single buffered']
    #allocation7 [shape = 's32[1]{0}', space=sflag, size = 0x4, scoped, tag = 'scoped memory for tpu_custom_call.1']
    #allocation8 [shape = 'u8[4096]{0}', space=vmem, size = 0x1000, scoped, tag = 'output window, operand 0, single buffered']
    %8 = vsyncpa [#allocation4], 0
    %9 = vsyncpa [#allocation7], 0
    %10 = vsyncpa [#allocation5], 0
    // Predicated region
    $region2: #{tpu_custom_call.1} parent=1 // pred_check
      _
    $region3: #{tpu_custom_call.1} parent=1 // pred_check_branch
      %12 = sbr.rel (0) target = $region5
    $region4: #{tpu_custom_call.1} parent=1 // pred_region
      %14 = vsyncadd [#allocation4], 0
      %s16 = sshll.u32 %s0, 4
      %s17 = int_to_ptr.hbm [resolvable:$true] %s16
      %s18 = sshll.u32 [#allocation3], 4
      %s19 = int_to_ptr.vmem [resolvable:$true] %s18
      %21 = dma.hbm_to_vmem [thread:$0]  %s17, 64, %s19, [#allocation4]
    $region5: #{tpu_custom_call.1} parent=1 // pred_fallthru
      _
    // Predicated region
    $region6: #{tpu_custom_call.1} parent=1 // pred_check
      _
    $region7: #{tpu_custom_call.1} parent=1 // pred_check_branch
      %23 = sbr.rel (0) target = $region9
    $region8: #{tpu_custom_call.1} parent=1 // pred_region
      %25 = vsyncadd [#allocation7], 0
      %s26 = sshll.u32 %s1, 4
      %s27 = int_to_ptr.hbm [resolvable:$true] %s26
      %s28 = sshll.u32 [#allocation6], 4
      %s29 = int_to_ptr.vmem [resolvable:$true] %s28
      %34 = dma.hbm_to_vmem [thread:$0]  %s27, 1024, %s29, [#allocation7], 64, 64, 4
    $region9: #{tpu_custom_call.1} parent=1 // pred_fallthru
      _
    // Predicated region
    $region10: #{tpu_custom_call.1} parent=1 // pred_check
      _
    $region11: #{tpu_custom_call.1} parent=1 // pred_check_branch
      %36 = sbr.rel (0) target = $region13
    $region12: #{tpu_custom_call.1} parent=1 // pred_region
      _
    $region13: #{tpu_custom_call.1} parent=1 // pred_fallthru
      _
    // Predicated region
    $region14: #{tpu_custom_call.1} parent=1 // pred_check
      _
    $region15: #{tpu_custom_call.1} parent=1 // pred_check_branch
      %38 = sbr.rel (0) target = $region17
    $region16: #{tpu_custom_call.1} parent=1 // pred_region
      %40 = dma.done [#allocation4], 64
    $region17: #{tpu_custom_call.1} parent=1 // pred_fallthru
      _
    // Predicated region
    $region18: #{tpu_custom_call.1} parent=1 // pred_check
      _
    $region19: #{tpu_custom_call.1} parent=1 // pred_check_branch
      %42 = sbr.rel (0) target = $region21
    $region20: #{tpu_custom_call.1} parent=1 // pred_region
      %44 = dma.done [#allocation7], 1024
    $region21: #{tpu_custom_call.1} parent=1 // pred_fallthru
      _
    %p45 = scmp.eq.s32.totalorder 0, 0
    // Predicated region
    $region22: #{tpu_custom_call.1} parent=1 // pred_check
      %p46 = pneg %p45
    $region23: #{tpu_custom_call.1} parent=1 // pred_check_branch
      %48 = sbr.rel (%p46) target = $region25
    $region24: #{tpu_custom_call.1} parent=1 // pred_region
      %49 = vst [vmem:[#allocation2] sm:$0xff] 0.0
    $region25: #{tpu_custom_call.1} parent=1 // pred_fallthru
      _
    %v50 = vld [vmem:[#allocation2] sm:$0xff]
    %v51 = vld [vmem:[#allocation3] sm:$0xf]
    %v52 = vld [vmem:[#allocation6] sm:$0xf]
    %v53 = vld [vmem:[#allocation6 + $0x4] sm:$0xf]
    %v54 = vld [vmem:[#allocation6 + $0x8] sm:$0xf]
    %v55 = vld [vmem:[#allocation6 + $0xc] sm:$0xf]
    %v56 = vld [vmem:[#allocation6 + $0x10] sm:$0xf]
    %v57 = vld [vmem:[#allocation6 + $0x14] sm:$0xf]
    %v58 = vld [vmem:[#allocation6 + $0x18] sm:$0xf]
    %v59 = vld [vmem:[#allocation6 + $0x1c] sm:$0xf]
    %v60 = vld [vmem:[#allocation6 + $0x20] sm:$0xf]
    %v61 = vld [vmem:[#allocation6 + $0x24] sm:$0xf]
    %v62 = vld [vmem:[#allocation6 + $0x28] sm:$0xf]
    %v63 = vld [vmem:[#allocation6 + $0x2c] sm:$0xf]
    %v64 = vld [vmem:[#allocation6 + $0x30] sm:$0xf]
    %v65 = vld [vmem:[#allocation6 + $0x34] sm:$0xf]
    %v66 = vld [vmem:[#allocation6 + $0x38] sm:$0xf]
    %v67 = vld [vmem:[#allocation6 + $0x3c] sm:$0xf]
    %v84 = vunpack.c.l.b16 %v52
    %v85 = vunpack.c.l.b16 %v53
    %v86 = vunpack.c.l.b16 %v54
    %v87 = vunpack.c.l.b16 %v55
    %v88 = vunpack.c.l.b16 %v56
    %v89 = vunpack.c.l.b16 %v57
    %v90 = vunpack.c.l.b16 %v58
    %v91 = vunpack.c.l.b16 %v59
    %v92 = vunpack.c.l.b16 %v60
    %v93 = vunpack.c.l.b16 %v61
    %v94 = vunpack.c.l.b16 %v62
    %v95 = vunpack.c.l.b16 %v63
    %v96 = vunpack.c.l.b16 %v64
    %v97 = vunpack.c.l.b16 %v65
    %v98 = vunpack.c.l.b16 %v66
    %v99 = vunpack.c.l.b16 %v67
    %v100 = vpack.c.b16 %v85, %v84
    %v101 = vpack.c.b16 %v87, %v86
    %v102 = vpack.c.b16 %v89, %v88
    %v103 = vpack.c.b16 %v91, %v90
    %v104 = vpack.c.b16 %v93, %v92
    %v105 = vpack.c.b16 %v95, %v94
    %v106 = vpack.c.b16 %v97, %v96
    %v107 = vpack.c.b16 %v99, %v98
    %116 = vmatpush.bf16.xpose.msra.mxu0 %v107
    %117 = vmatpush.bf16.xpose.msra.mxu0 %v106
    %118 = vmatpush.bf16.xpose.msra.mxu0 %v105
    %119 = vmatpush.bf16.xpose.msra.mxu0 %v104
    %120 = vmatpush.bf16.xpose.msra.mxu0 %v103
    %121 = vmatpush.bf16.xpose.msra.mxu0 %v102
    %122 = vmatpush.bf16.xpose.msra.mxu0 %v101
    %123 = vmatpush.bf16.xpose.msra.mxu0 %v100
    %124 = vmatmul.bf16.gmra.mxu0 %v51
    %v125 = vpop.f32.mrf.mxu0
    %v126 = vadd.f32 0.0, %v125
    %v127 = vpop.f32.mrf.mxu0
    %128 = vdwg.mxu0
    %v129 = vadd.f32 %v50, %v126
    %130 = vst [vmem:[#allocation2] sm:$0xff] %v129
    // Predicated region
    $region26: #{tpu_custom_call.1} parent=1 // pred_check
      %p131 = pneg %p45
    $region27: #{tpu_custom_call.1} parent=1 // pred_check_branch
      %133 = sbr.rel (%p131) target = $region29
    $region28: #{tpu_custom_call.1} parent=1 // pred_region
      %v134 = vld [vmem:[#allocation2] sm:$0xff]
      %v135 = vld [vmem:[%s2] sm:$0x1]
      %v137 = vperm.slane %v135, 0
      %v139 = vadd.f32 %v134, %v137
      %140 = vst [vmem:[#allocation8] sm:$0xff] %v139
    $region29: #{tpu_custom_call.1} parent=1 // pred_fallthru
      _
    // Predicated region
    $region30: #{tpu_custom_call.1} parent=1 // pred_check
      _
    $region31: #{tpu_custom_call.1} parent=1 // pred_check_branch
      %142 = sbr.rel (0) target = $region33
    $region32: #{tpu_custom_call.1} parent=1 // pred_region
      %144 = vsyncadd [#allocation5], 0
      %s146 = sshll.u32 [#allocation8], 4
      %s147 = int_to_ptr.vmem [resolvable:$true] %s146
      %s148 = sshll.u32 %s3, 4
      %s149 = int_to_ptr.hbm [resolvable:$true] %s148
      %151 = dma.vmem_to_hbm [thread:$0]  %s147, 128, %s149, [#allocation5]
    $region33: #{tpu_custom_call.1} parent=1 // pred_fallthru
      _
    // Predicated region
    $region34: #{tpu_custom_call.1} parent=1 // pred_check
      _
    $region35: #{tpu_custom_call.1} parent=1 // pred_check_branch
      %153 = sbr.rel (0) target = $region37
    $region36: #{tpu_custom_call.1} parent=1 // pred_region
      %155 = dma.done [#allocation5], 128
    $region37: #{tpu_custom_call.1} parent=1 // pred_fallthru
      _
    %156 = vsyncpa [#allocation4], 1
    %157 = vsyncpa [#allocation7], 1
    %158 = vsyncpa [#allocation5], 1

</llo_original>
